<compile_context>
chip_gen: v7x
topology: tpu7x:2x2x1
jax: 0.10.0
libtpu: 0.0.40
codegen_flags: <defaults>
</compile_context>

<pallas_src>
import functools

import jax
import jax.numpy as jnp
from jax.experimental import pallas as pl
from jax.experimental.pallas import tpu as pltpu


def _round_up(x: int, m: int) -> int:
    return (x + m - 1) // m * m


def make_encoder_kernel(num_hidden_layers: int, conditional: bool,
                        num_classes: int, compute_dtype):
    """Fused kernel: (Linear+ReLU) x L  ->  fused (means | log_vars) head.

    Ref layout (inputs..., output):
      conditional:  x, c, w0_main, w0_class, b0, [w_i, b_i]_{i>=1}, w_head, b_head, out
      otherwise:    x,    w0,               b0, [w_i, b_i]_{i>=1}, w_head, b_head, out
    Weights arrive pre-cast to `compute_dtype` (bf16); accumulation, bias-add
    and ReLU are all float32.
    """

    def kernel(*refs):
        out_ref = refs[-1]
        idx = 0
        x = refs[idx][...]                       # (TM, in_dim) f32
        idx += 1

        if conditional:
            c = refs[idx][...]                   # (TM, 1) int32
            idx += 1
            w0m = refs[idx][...]                 # (in_dim, H0) bf16
            w0c = refs[idx + 1][...]             # (num_classes, H0) bf16
            b0 = refs[idx + 2][...]              # (1, H0) f32
            idx += 3
            tm = x.shape[0]
            lane = jax.lax.broadcasted_iota(jnp.int32, (tm, num_classes), 1)
            onehot = (lane == c).astype(compute_dtype)   # (TM, num_classes)
            h = (jnp.dot(x.astype(compute_dtype), w0m,
                         preferred_element_type=jnp.float32)
                 + jnp.dot(onehot, w0c, preferred_element_type=jnp.float32)
                 + b0)
        else:
            w0 = refs[idx][...]
            b0 = refs[idx + 1][...]
            idx += 2
            h = jnp.dot(x.astype(compute_dtype), w0,
                        preferred_element_type=jnp.float32) + b0
        h = jnp.maximum(h, 0.0)

        for _ in range(1, num_hidden_layers):
            w = refs[idx][...]
            b = refs[idx + 1][...]
            idx += 2
            h = jnp.dot(h.astype(compute_dtype), w,
                        preferred_element_type=jnp.float32) + b
            h = jnp.maximum(h, 0.0)

        # Fused, lane-padded (means | log_vars | 0-pad) head -> single
        # lane-dense store of (TM, head_pad).
        w_head = refs[idx][...]
        b_head = refs[idx + 1][...]
        out_ref[...] = (jnp.dot(h.astype(compute_dtype), w_head,
                                preferred_element_type=jnp.float32)
                        + b_head).astype(out_ref.dtype)

    return kernel


def init_encoder_params(key, layer_sizes, latent_size, conditional, num_classes):
    """Deterministic init mirroring the shapes of the PyTorch module."""
    layer_sizes = list(layer_sizes)
    if conditional:
        layer_sizes[0] += num_classes

    def linear_init(k, fan_in, fan_out):
        kw, kb = jax.random.split(k)
        bound = 1.0 / jnp.sqrt(jnp.float32(fan_in))
        w = jax.random.uniform(kw, (fan_in, fan_out), jnp.float32, -bound, bound)
        b = jax.random.uniform(kb, (1, fan_out), jnp.float32, -bound, bound)
        return w, b

    params = {"hidden": []}
    keys = jax.random.split(key, len(layer_sizes) + 1)
    for i, (in_size, out_size) in enumerate(zip(layer_sizes[:-1], layer_sizes[1:])):
        params["hidden"].append(linear_init(keys[i], in_size, out_size))
    km, kv = jax.random.split(keys[-1])
    params["wm"], params["bm"] = linear_init(km, layer_sizes[-1], latent_size)
    params["wv"], params["bv"] = linear_init(kv, layer_sizes[-1], latent_size)
    return params


@functools.partial(jax.jit, static_argnames=("conditional", "num_classes", "tile_m"))
def encoder_forward(x, c, params, conditional=True, num_classes=10, tile_m=128):
    """Matches Encoder.forward(x, c) -> (means, log_vars)."""
    compute_dtype = jnp.bfloat16

    B, in_dim = x.shape
    num_hidden = len(params["hidden"])
    hidden_dim = params["wm"].shape[0]
    latent = params["wm"].shape[1]
    head_out = 2 * latent
    head_pad = _round_up(head_out, 128)          # lane-dense output slab

    # ---- fuse the two heads into one lane-padded weight / bias ----
    w_head = jnp.zeros((hidden_dim, head_pad), jnp.float32)
    w_head = w_head.at[:, :latent].set(params["wm"])
    w_head = w_head.at[:, latent:head_out].set(params["wv"])
    b_head = jnp.zeros((1, head_pad), jnp.float32)
    b_head = b_head.at[:, :latent].set(params["bm"])
    b_head = b_head.at[:, latent:head_out].set(params["bv"])

    def wcast(w):  # bf16 operands for the MXU (f32 accumulation in-kernel)
        return w.astype(compute_dtype)

    flat_params = []
    w0, b0 = params["hidden"][0]
    if conditional:
        flat_params += [wcast(w0[:in_dim]), wcast(w0[in_dim:]), b0]
    else:
        flat_params += [wcast(w0), b0]
    for w, b in params["hidden"][1:]:
        flat_params += [wcast(w), b]
    flat_params += [wcast(w_head), b_head]

    # ---- batch tiling (f32 activations: sublane multiple of 8) ----
    tm = tile_m if B >= tile_m else _round_up(max(B, 1), 8)
    b_pad = _round_up(B, tm)
    grid = (b_pad // tm,)

    x_p = x.astype(jnp.float32)
    if b_pad != B:
        x_p = jnp.pad(x_p, ((0, b_pad - B), (0, 0)))

    in_specs = [pl.BlockSpec((tm, in_dim), lambda i: (i, 0))]
    call_inputs = [x_p]
    if conditional:
        c_p = c.astype(jnp.int32).reshape(-1, 1)
        if b_pad != B:
            c_p = jnp.pad(c_p, ((0, b_pad - B), (0, 0)))
        in_specs.append(pl.BlockSpec((tm, 1), lambda i: (i, 0)))
        call_inputs.append(c_p)
    for p in flat_params:
        # Full-array blocks with a constant index_map: weights stay resident
        # in VMEM across batch-grid steps.
        in_specs.append(pl.BlockSpec(p.shape, lambda i: (0, 0)))
        call_inputs.append(p)

    out_spec = pl.BlockSpec((tm, head_pad), lambda i: (i, 0))

    # ---- advisory cost estimate for the XLA scheduler ----
    flops = 0
    bytes_accessed = x_p.size * 4 + b_pad * head_pad * 4
    for p in flat_params:
        bytes_accessed += p.size * p.dtype.itemsize
        if p.ndim == 2 and p.shape[0] > 1:       # matmul weights (skip biases)
            flops += 2 * b_pad * p.shape[0] * p.shape[1]
    if conditional:
        bytes_accessed += b_pad * 4              # the int32 class column
    cost = pl.CostEstimate(flops=flops, transcendentals=0,
                           bytes_accessed=bytes_accessed)

    kernel = make_encoder_kernel(num_hidden, conditional, num_classes,
                                 compute_dtype)

    out = pl.pallas_call(
        kernel,
        out_shape=jax.ShapeDtypeStruct((b_pad, head_pad), jnp.float32),
        grid=grid,
        in_specs=in_specs,
        out_specs=out_spec,
        compiler_params=pltpu.CompilerParams(
            dimension_semantics=("parallel",)),   # v7x: shard batch over 2 TCs
        cost_estimate=cost,
    )(*call_inputs)

    out = out[:B]
    means = out[:, :latent]
    log_vars = out[:, latent:head_out]
    return means, log_vars


def encoder_forward_ref(x, c, params, conditional=True, num_classes=10):
    """Pure-JAX (f32) reference for correctness checking."""
    if conditional:
        onehot = jax.nn.one_hot(c, num_classes, dtype=x.dtype)
        x = jnp.concatenate([x, onehot], axis=-1)
    h = x
    for w, b in params["hidden"]:
        h = jnp.maximum(h @ w + b, 0.0)
    return h @ params["wm"] + params["bm"], h @ params["wv"] + params["bv"]


if __name__ == "__main__":
    # Small, module-consistent configuration:
    #   layer_sizes=[32, 64, 64], latent=8, conditional=True, num_classes=10
    layer_sizes = [32, 64, 64]
    latent_size = 8
    conditional = True
    num_classes = 10
    batch = 4

    key = jax.random.PRNGKey(0)
    k_params, k_x, k_c = jax.random.split(key, 3)

    params = init_encoder_params(k_params, layer_sizes, latent_size,
                                 conditional, num_classes)
    x = jax.random.normal(k_x, (batch, layer_sizes[0]), jnp.float32)
    c = jax.random.randint(k_c, (batch,), 0, num_classes)

    means, log_vars = encoder_forward(x, c, params, conditional=conditional,
                                      num_classes=num_classes)
    jax.block_until_ready((means, log_vars))

    means_ref, log_vars_ref = encoder_forward_ref(x, c, params,
                                                  conditional=conditional,
                                                  num_classes=num_classes)
    assert means.shape == (batch, latent_size)
    assert log_vars.shape == (batch, latent_size)
    # bf16 matmul operands with f32 accumulation -> loosened tolerance vs f32 ref.
    assert jnp.allclose(means, means_ref, atol=5e-2, rtol=5e-2), (
        float(jnp.max(jnp.abs(means - means_ref))))
    assert jnp.allclose(log_vars, log_vars_ref, atol=5e-2, rtol=5e-2), (
        float(jnp.max(jnp.abs(log_vars - log_vars_ref))))

    print("KERNEL_OK")
</pallas_src>

<mosaic_0001>
module attributes {stable_mosaic.version = 11 : i64} {
  func.func @kernel(%arg0: i32, %arg1: memref<8x32xf32, #tpu.memory_space<vmem>>, %arg2: memref<8x1xi32, #tpu.memory_space<vmem>>, %arg3: memref<32x64xbf16, #tpu.memory_space<vmem>>, %arg4: memref<10x64xbf16, #tpu.memory_space<vmem>>, %arg5: memref<1x64xf32, #tpu.memory_space<vmem>>, %arg6: memref<64x64xbf16, #tpu.memory_space<vmem>>, %arg7: memref<1x64xf32, #tpu.memory_space<vmem>>, %arg8: memref<64x128xbf16, #tpu.memory_space<vmem>>, %arg9: memref<1x128xf32, #tpu.memory_space<vmem>>, %arg10: memref<8x128xf32, #tpu.memory_space<vmem>>) attributes {dimension_semantics = [#tpu.dimension_semantics<parallel>], iteration_bounds = array<i64: 1>, scalar_prefetch = 0 : i64, scratch_operands = 0 : i64, tpu.core_type = #tpu.core_type<tc>, window_params = [{transform_indices = @transform_0, window_bounds = array<i64: 8, 32>}, {transform_indices = @transform_1, window_bounds = array<i64: 8, 1>}, {pipeline_mode = #tpu.pipeline_mode<synchronous>, transform_indices = @transform_2, window_bounds = array<i64: 32, 64>}, {pipeline_mode = #tpu.pipeline_mode<synchronous>, transform_indices = @transform_3, window_bounds = array<i64: 10, 64>}, {pipeline_mode = #tpu.pipeline_mode<synchronous>, transform_indices = @transform_4, window_bounds = array<i64: 1, 64>}, {pipeline_mode = #tpu.pipeline_mode<synchronous>, transform_indices = @transform_5, window_bounds = array<i64: 64, 64>}, {pipeline_mode = #tpu.pipeline_mode<synchronous>, transform_indices = @transform_6, window_bounds = array<i64: 1, 64>}, {pipeline_mode = #tpu.pipeline_mode<synchronous>, transform_indices = @transform_7, window_bounds = array<i64: 64, 128>}, {pipeline_mode = #tpu.pipeline_mode<synchronous>, transform_indices = @transform_8, window_bounds = array<i64: 1, 128>}, {transform_indices = @transform_9, window_bounds = array<i64: 8, 128>}]} {
    %c0 = arith.constant 0 : index
    %c0_0 = arith.constant 0 : index
    %0 = vector.load %arg1[%c0, %c0_0] : memref<8x32xf32, #tpu.memory_space<vmem>>, vector<8x32xf32>
    %c0_1 = arith.constant 0 : index
    %c0_2 = arith.constant 0 : index
    %1 = vector.load %arg2[%c0_1, %c0_2] : memref<8x1xi32, #tpu.memory_space<vmem>>, vector<8x1xi32>
    %c0_3 = arith.constant 0 : index
    %c0_4 = arith.constant 0 : index
    %2 = vector.load %arg3[%c0_3, %c0_4] : memref<32x64xbf16, #tpu.memory_space<vmem>>, vector<32x64xbf16>
    %c0_5 = arith.constant 0 : index
    %c0_6 = arith.constant 0 : index
    %3 = vector.load %arg4[%c0_5, %c0_6] : memref<10x64xbf16, #tpu.memory_space<vmem>>, vector<10x64xbf16>
    %c0_7 = arith.constant 0 : index
    %c0_8 = arith.constant 0 : index
    %4 = vector.load %arg5[%c0_7, %c0_8] : memref<1x64xf32, #tpu.memory_space<vmem>>, vector<1x64xf32>
    %5 = tpu.iota {dimensions = array<i32: 1>} : vector<8x10xi32>
    %6 = vector.broadcast %1 : vector<8x1xi32> to vector<8x10xi32>
    %7 = arith.cmpi eq, %5, %6 : vector<8x10xi32>
    %8 = arith.extui %7 : vector<8x10xi1> to vector<8x10xi32>
    %9 = arith.sitofp %8 : vector<8x10xi32> to vector<8x10xf32>
    %10 = arith.truncf %9 : vector<8x10xf32> to vector<8x10xbf16>
    %11 = arith.truncf %0 : vector<8x32xf32> to vector<8x32xbf16>
    %cst = arith.constant dense<0.000000e+00> : vector<8x64xf32>
    %12 = tpu.matmul %11, %2, %cst {dimension_numbers = #tpu.dot_dimension_numbers<[1], [0], [0], [1], [0, 0, 1, 1], [], []>} : vector<8x32xbf16>, vector<32x64xbf16>, vector<8x64xf32> -> vector<8x64xf32>
    %cst_9 = arith.constant dense<0.000000e+00> : vector<8x64xf32>
    %13 = tpu.matmul %10, %3, %cst_9 {dimension_numbers = #tpu.dot_dimension_numbers<[1], [0], [0], [1], [0, 0, 1, 1], [], []>} : vector<8x10xbf16>, vector<10x64xbf16>, vector<8x64xf32> -> vector<8x64xf32>
    %14 = arith.addf %12, %13 : vector<8x64xf32>
    %15 = vector.broadcast %4 : vector<1x64xf32> to vector<8x64xf32>
    %16 = arith.addf %14, %15 : vector<8x64xf32>
    %cst_10 = arith.constant 0.000000e+00 : f32
    %17 = vector.broadcast %cst_10 : f32 to vector<8x64xf32>
    %18 = arith.maximumf %16, %17 : vector<8x64xf32>
    %c0_11 = arith.constant 0 : index
    %c0_12 = arith.constant 0 : index
    %19 = vector.load %arg6[%c0_11, %c0_12] : memref<64x64xbf16, #tpu.memory_space<vmem>>, vector<64x64xbf16>
    %c0_13 = arith.constant 0 : index
    %c0_14 = arith.constant 0 : index
    %20 = vector.load %arg7[%c0_13, %c0_14] : memref<1x64xf32, #tpu.memory_space<vmem>>, vector<1x64xf32>
    %21 = arith.truncf %18 : vector<8x64xf32> to vector<8x64xbf16>
    %cst_15 = arith.constant dense<0.000000e+00> : vector<8x64xf32>
    %22 = tpu.matmul %21, %19, %cst_15 {dimension_numbers = #tpu.dot_dimension_numbers<[1], [0], [0], [1], [0, 0, 1, 1], [], []>} : vector<8x64xbf16>, vector<64x64xbf16>, vector<8x64xf32> -> vector<8x64xf32>
    %23 = vector.broadcast %20 : vector<1x64xf32> to vector<8x64xf32>
    %24 = arith.addf %22, %23 : vector<8x64xf32>
    %cst_16 = arith.constant 0.000000e+00 : f32
    %25 = vector.broadcast %cst_16 : f32 to vector<8x64xf32>
    %26 = arith.maximumf %24, %25 : vector<8x64xf32>
    %c0_17 = arith.constant 0 : index
    %c0_18 = arith.constant 0 : index
    %27 = vector.load %arg8[%c0_17, %c0_18] : memref<64x128xbf16, #tpu.memory_space<vmem>>, vector<64x128xbf16>
    %c0_19 = arith.constant 0 : index
    %c0_20 = arith.constant 0 : index
    %28 = vector.load %arg9[%c0_19, %c0_20] : memref<1x128xf32, #tpu.memory_space<vmem>>, vector<1x128xf32>
    %29 = arith.truncf %26 : vector<8x64xf32> to vector<8x64xbf16>
    %cst_21 = arith.constant dense<0.000000e+00> : vector<8x128xf32>
    %30 = tpu.matmul %29, %27, %cst_21 {dimension_numbers = #tpu.dot_dimension_numbers<[1], [0], [0], [1], [0, 0, 1, 1], [], []>} : vector<8x64xbf16>, vector<64x128xbf16>, vector<8x128xf32> -> vector<8x128xf32>
    %31 = vector.broadcast %28 : vector<1x128xf32> to vector<8x128xf32>
    %32 = arith.addf %30, %31 : vector<8x128xf32>
    %c0_22 = arith.constant 0 : index
    %c0_23 = arith.constant 0 : index
    %33 = vector.load %arg10[%c0_22, %c0_23] : memref<8x128xf32, #tpu.memory_space<vmem>>, vector<8x128xf32>
    tpu.vector_store %arg10[%c0_22, %c0_23], %32 {strides = array<i32>} : memref<8x128xf32, #tpu.memory_space<vmem>>, vector<8x128xf32>,
    return
  }
  func.func @transform_0(%arg0: i32) -> (i32, i32) {
    %c0_i32 = arith.constant 0 : i32
    %c0_i32_0 = arith.constant 0 : i32
    return %arg0, %c0_i32 : i32, i32
  }
  func.func @transform_1(%arg0: i32) -> (i32, i32) {
    %c0_i32 = arith.constant 0 : i32
    %c0_i32_0 = arith.constant 0 : i32
    return %arg0, %c0_i32 : i32, i32
  }
  func.func @transform_2(%arg0: i32) -> (i32, i32) {
    %c0_i32 = arith.constant 0 : i32
    %c0_i32_0 = arith.constant 0 : i32
    %c0_i32_1 = arith.constant 0 : i32
    return %c0_i32, %c0_i32_0 : i32, i32
  }
  func.func @transform_3(%arg0: i32) -> (i32, i32) {
    %c0_i32 = arith.constant 0 : i32
    %c0_i32_0 = arith.constant 0 : i32
    %c0_i32_1 = arith.constant 0 : i32
    return %c0_i32, %c0_i32_0 : i32, i32
  }
  func.func @transform_4(%arg0: i32) -> (i32, i32) {
    %c0_i32 = arith.constant 0 : i32
    %c0_i32_0 = arith.constant 0 : i32
    %c0_i32_1 = arith.constant 0 : i32
    return %c0_i32, %c0_i32_0 : i32, i32
  }
  func.func @transform_5(%arg0: i32) -> (i32, i32) {
    %c0_i32 = arith.constant 0 : i32
    %c0_i32_0 = arith.constant 0 : i32
    %c0_i32_1 = arith.constant 0 : i32
    return %c0_i32, %c0_i32_0 : i32, i32
  }
  func.func @transform_6(%arg0: i32) -> (i32, i32) {
    %c0_i32 = arith.constant 0 : i32
    %c0_i32_0 = arith.constant 0 : i32
    %c0_i32_1 = arith.constant 0 : i32
    return %c0_i32, %c0_i32_0 : i32, i32
  }
  func.func @transform_7(%arg0: i32) -> (i32, i32) {
    %c0_i32 = arith.constant 0 : i32
    %c0_i32_0 = arith.constant 0 : i32
    %c0_i32_1 = arith.constant 0 : i32
    return %c0_i32, %c0_i32_0 : i32, i32
  }
  func.func @transform_8(%arg0: i32) -> (i32, i32) {
    %c0_i32 = arith.constant 0 : i32
    %c0_i32_0 = arith.constant 0 : i32
    %c0_i32_1 = arith.constant 0 : i32
    return %c0_i32, %c0_i32_0 : i32, i32
  }
  func.func @transform_9(%arg0: i32) -> (i32, i32) {
    %c0_i32 = arith.constant 0 : i32
    %c0_i32_0 = arith.constant 0 : i32
    return %arg0, %c0_i32 : i32, i32
  }
}

</mosaic_0001>

<llo_original>
// kernel: encoder_forward.1
$region0: #{encoder_forward.1}
  #allocation0 [shape = 'u32[]', space=smem, size = 0x4, offset = 0x4, fixed_abs, tag = 'smem constant byte address 0x4 - core index']
  #allocation1 [shape = 'u32[144,128]{1,0:T(1,128)}', space=vmem, size = 0x12000, scoped, tag = 'internal scratch']
  %s0 = inlined_call_operand.vmem [shape: f32[8,32], index: 0, kind: input, shape index: {}]
  %s1 = inlined_call_operand.vmem [shape: s32[8,1], index: 1, kind: input, shape index: {}]
  %s2 = inlined_call_operand.vmem [shape: bf16[32,64], index: 2, kind: input, shape index: {}]
  %s3 = inlined_call_operand.vmem [shape: bf16[10,64], index: 3, kind: input, shape index: {}]
  %s4 = inlined_call_operand.vmem [shape: f32[1,64], index: 4, kind: input, shape index: {}]
  %s5 = inlined_call_operand.vmem [shape: bf16[64,64], index: 5, kind: input, shape index: {}]
  %s6 = inlined_call_operand.vmem [shape: f32[1,64], index: 6, kind: input, shape index: {}]
  %s7 = inlined_call_operand.vmem [shape: bf16[64,128], index: 7, kind: input, shape index: {}]
  %s8 = inlined_call_operand.vmem [shape: f32[1,128], index: 8, kind: input, shape index: {}]
  %s9 = inlined_call_operand.vmem [shape: f32[8,128], index: 9, kind: output, shape index: {}]
  %s10 = sld [smem:[#allocation0]]
  $region46: #{encoder_forward.1} parent=0
    _
  %s12 = ssub.s32 1, %s10
  %s13 = scalar_select 0, %s12, %s10
  // Predicated region
  $region2: #{encoder_forward.1} parent=0 // pred_check
    _
  $region3: #{encoder_forward.1} parent=0 // pred_check_branch
    %15 = sbr.rel (0) target = $region5
  $region4: #{encoder_forward.1} parent=0 // pred_region
    _
  $region5: #{encoder_forward.1} parent=0 // pred_fallthru
    _
  // Predicated region
  $region6: #{encoder_forward.1} parent=0 // pred_check
    _
  $region7: #{encoder_forward.1} parent=0 // pred_check_branch
    %17 = sbr.rel (0) target = $region9
  $region8: #{encoder_forward.1} parent=0 // pred_region
    _
  $region9: #{encoder_forward.1} parent=0 // pred_fallthru
    _
  // Predicated region
  $region10: #{encoder_forward.1} parent=0 // pred_check
    _
  $region11: #{encoder_forward.1} parent=0 // pred_check_branch
    %19 = sbr.rel (0) target = $region13
  $region12: #{encoder_forward.1} parent=0 // pred_region
    _
  $region13: #{encoder_forward.1} parent=0 // pred_fallthru
    _
  // Predicated region
  $region14: #{encoder_forward.1} parent=0 // pred_check
    _
  $region15: #{encoder_forward.1} parent=0 // pred_check_branch
    %21 = sbr.rel (0) target = $region17
  $region16: #{encoder_forward.1} parent=0 // pred_region
    _
  $region17: #{encoder_forward.1} parent=0 // pred_fallthru
    _
  // Predicated region
  $region18: #{encoder_forward.1} parent=0 // pred_check
    _
  $region19: #{encoder_forward.1} parent=0 // pred_check_branch
    %23 = sbr.rel (0) target = $region21
  $region20: #{encoder_forward.1} parent=0 // pred_region
    _
  $region21: #{encoder_forward.1} parent=0 // pred_fallthru
    _
  // Predicated region
  $region22: #{encoder_forward.1} parent=0 // pred_check
    _
  $region23: #{encoder_forward.1} parent=0 // pred_check_branch
    %25 = sbr.rel (0) target = $region25
  $region24: #{encoder_forward.1} parent=0 // pred_region
    _
  $region25: #{encoder_forward.1} parent=0 // pred_fallthru
    _
  // Predicated region
  $region26: #{encoder_forward.1} parent=0 // pred_check
    _
  $region27: #{encoder_forward.1} parent=0 // pred_check_branch
    %27 = sbr.rel (0) target = $region29
  $region28: #{encoder_forward.1} parent=0 // pred_region
    _
  $region29: #{encoder_forward.1} parent=0 // pred_fallthru
    _
  // Predicated region
  $region30: #{encoder_forward.1} parent=0 // pred_check
    _
  $region31: #{encoder_forward.1} parent=0 // pred_check_branch
    %29 = sbr.rel (0) target = $region33
  $region32: #{encoder_forward.1} parent=0 // pred_region
    _
  $region33: #{encoder_forward.1} parent=0 // pred_fallthru
    _
  // Predicated region
  $region34: #{encoder_forward.1} parent=0 // pred_check
    _
  $region35: #{encoder_forward.1} parent=0 // pred_check_branch
    %31 = sbr.rel (0) target = $region37
  $region36: #{encoder_forward.1} parent=0 // pred_region
    _
  $region37: #{encoder_forward.1} parent=0 // pred_fallthru
    _
  %v33 = vld [vmem:[%s0] sm:$0xff]
  %v34 = vld [vmem:[%s1] sm:$0xff]
  %v35 = vld [vmem:[%s2] sm:$0xf]
  %v36 = vld [vmem:[%s2 + $0x4] sm:$0xf]
  %v37 = vld [vmem:[%s2 + $0x8] sm:$0xf]
  %v38 = vld [vmem:[%s2 + $0xc] sm:$0xf]
  %v39 = vld [vmem:[%s3] sm:$0xf]
  %v40 = vld [vmem:[%s3 + $0x4] sm:$0x1]
  %v41 = vld [vmem:[%s4] sm:$0x1]
  %v42 = vlaneseq
  %v43 = vand.u32 %v42, 127
  %44 = vset.pattern.permute.xlu0 0
  %45 = vperm.xlu0 %44, %v34
  %v46 = vpop.permute.xlu0 %45
  %vm47 = vcmp.eq.s32.totalorder %v43, %v46
  %v48 = vsel %vm47, 1, 0
  %v49 = vcvt.s32.f32 %v48
  %v50 = vpack.c.bf16 %v49, %v49
  %v51 = vpack.c.bf16 %v33, %v33
  %v54 = vunpack.c.l.b16 %v39
  %v55 = vunpack.c.l.b16 %v40
  %v56 = vpack.c.b16 %v55, %v54
  %vm57 = vcmask 80896
  %v59 = vsel %vm57, %v50, 0
  %vm61 = vcmask 1044480
  %v63 = vsel %vm61, %v56, 0
  %65 = vmatprep.subr.bf16.mxu0 0
  %66 = vmatpush1.bf16.msra.mxu0 %v63
  %67 = vmatprep.subr.bf16.mxu0 0
  %68 = vmatpush1.bf16.msra.mxu0 0
  %69 = vmatprep.subr.bf16.mxu0 0
  %70 = vmatpush1.bf16.msra.mxu0 0
  %71 = vmatprep.subr.bf16.mxu0 0
  %72 = vmatpush1.bf16.msra.mxu0 0
  %73 = vmatprep.subr.bf16.mxu0 0
  %74 = vmatpush1.bf16.msra.mxu0 0
  %75 = vmatprep.subr.bf16.mxu0 0
  %76 = vmatpush1.bf16.msra.mxu0 0
  %77 = vmatprep.subr.bf16.mxu0 0
  %78 = vmatpush1.bf16.msra.mxu0 0
  %79 = vmatprep.subr.bf16.mxu0 0
  %80 = vmatpush1.bf16.msra.mxu0 0
  %81 = vmatprep.subr.bf16.mxu0 0
  %82 = vmatpush1.bf16.msra.mxu0 0
  %83 = vmatprep.subr.bf16.mxu0 0
  %84 = vmatpush1.bf16.msra.mxu0 0
  %85 = vmatprep.subr.bf16.mxu0 0
  %86 = vmatpush1.bf16.msra.mxu0 0
  %87 = vmatprep.subr.bf16.mxu0 0
  %88 = vmatpush1.bf16.msra.mxu0 0
  %89 = vmatprep.subr.bf16.mxu0 0
  %90 = vmatpush1.bf16.msra.mxu0 0
  %91 = vmatprep.subr.bf16.mxu0 0
  %92 = vmatpush1.bf16.msra.mxu0 0
  %93 = vmatprep.subr.bf16.mxu0 0
  %94 = vmatpush1.bf16.msra.mxu0 0
  %95 = vmatprep.subr.bf16.mxu0 0
  %96 = vmatpush1.bf16.msra.mxu0 0
  %97 = vmatprep.mubr.bf16.mxu0 0
  %98 = vmatmul.mubr.bf16.gmra.mrb[0].mxu0 %v59
  %v99 = vpop.f32.mrb[0].mxu0
  %v100 = vadd.f32 0.0, %v99
  %v101 = vpop.f32.mrb[0].mxu0
  %v102 = vpop.f32.mrb[0].mxu0
  %v103 = vpop.f32.mrb[0].mxu0
  %104 = vdwg.mxu0
  %v109 = vunpack.c.l.b16 %v35
  %v110 = vunpack.c.l.b16 %v36
  %v111 = vunpack.c.l.b16 %v37
  %v112 = vunpack.c.l.b16 %v38
  %v113 = vpack.c.b16 %v110, %v109
  %v114 = vpack.c.b16 %v112, %v111
  %vm117 = vcmask 261120
  %v119 = vsel %vm117, %v51, 0
  %121 = vmatprep.subr.bf16.mxu0 0
  %122 = vmatpush1.bf16.msra.mxu0 %v113
  %123 = vmatprep.subr.bf16.mxu0 0
  %124 = vmatpush1.bf16.msra.mxu0 %v114
  %125 = vmatprep.subr.bf16.mxu0 0
  %126 = vmatpush1.bf16.msra.mxu0 0
  %127 = vmatprep.subr.bf16.mxu0 0
  %128 = vmatpush1.bf16.msra.mxu0 0
  %129 = vmatprep.subr.bf16.mxu0 0
  %130 = vmatpush1.bf16.msra.mxu0 0
  %131 = vmatprep.subr.bf16.mxu0 0
  %132 = vmatpush1.bf16.msra.mxu0 0
  %133 = vmatprep.subr.bf16.mxu0 0
  %134 = vmatpush1.bf16.msra.mxu0 0
  %135 = vmatprep.subr.bf16.mxu0 0
  %136 = vmatpush1.bf16.msra.mxu0 0
  %137 = vmatprep.subr.bf16.mxu0 0
  %138 = vmatpush1.bf16.msra.mxu0 0
  %139 = vmatprep.subr.bf16.mxu0 0
  %140 = vmatpush1.bf16.msra.mxu0 0
  %141 = vmatprep.subr.bf16.mxu0 0
  %142 = vmatpush1.bf16.msra.mxu0 0
  %143 = vmatprep.subr.bf16.mxu0 0
  %144 = vmatpush1.bf16.msra.mxu0 0
  %145 = vmatprep.subr.bf16.mxu0 0
  %146 = vmatpush1.bf16.msra.mxu0 0
  %147 = vmatprep.subr.bf16.mxu0 0
  %148 = vmatpush1.bf16.msra.mxu0 0
  %149 = vmatprep.subr.bf16.mxu0 0
  %150 = vmatpush1.bf16.msra.mxu0 0
  %151 = vmatprep.subr.bf16.mxu0 0
  %152 = vmatpush1.bf16.msra.mxu0 0
  %153 = vmatprep.mubr.bf16.mxu0 0
  %154 = vmatmul.mubr.bf16.gmra.mrb[0].mxu0 %v119
  %v155 = vpop.f32.mrb[0].mxu0
  %v156 = vadd.f32 %v100, %v155
  %v157 = vpop.f32.mrb[0].mxu0
  %v158 = vpop.f32.mrb[0].mxu0
  %v159 = vpop.f32.mrb[0].mxu0
  %160 = vdwg.mxu0
  %v162 = vlaneseq
  %v163 = vshrl.u32 %v162, 7
  %v164 = vsub.s32 0, %v163
  %v165 = vrot.slane %v41, %v164
  %v167 = vadd.f32 %v156, %v165
  %v168 = vmax.f32 %v167, 0.0
  %v169 = vld [vmem:[%s5] sm:$0xf]
  %v170 = vld [vmem:[%s5 + $0x4] sm:$0xf]
  %v171 = vld [vmem:[%s5 + $0x8] sm:$0xf]
  %v172 = vld [vmem:[%s5 + $0xc] sm:$0xf]
  %v173 = vld [vmem:[%s5 + $0x10] sm:$0xf]
  %v174 = vld [vmem:[%s5 + $0x14] sm:$0xf]
  %v175 = vld [vmem:[%s5 + $0x18] sm:$0xf]
  %v176 = vld [vmem:[%s5 + $0x1c] sm:$0xf]
  %v177 = vld [vmem:[%s6] sm:$0x1]
  %v178 = vpack.c.bf16 %v168, %v168
  %v180 = vlaneseq
  %v181 = vshrl.u32 %v180, 7
  %v182 = vsub.s32 0, %v181
  %v183 = vrot.slane %v177, %v182
  %v193 = vunpack.c.l.b16 %v169
  %v194 = vunpack.c.l.b16 %v170
  %v195 = vunpack.c.l.b16 %v171
  %v196 = vunpack.c.l.b16 %v172
  %v197 = vunpack.c.l.b16 %v173
  %v198 = vunpack.c.l.b16 %v174
  %v199 = vunpack.c.l.b16 %v175
  %v200 = vunpack.c.l.b16 %v176
  %v201 = vpack.c.b16 %v194, %v193
  %v202 = vpack.c.b16 %v196, %v195
  %v203 = vpack.c.b16 %v198, %v197
  %v204 = vpack.c.b16 %v200, %v199
  %vm209 = vcmask 523264
  %v211 = vsel %vm209, %v178, 0
  %213 = vmatprep.subr.bf16.mxu0 0
  %214 = vmatpush1.bf16.msra.mxu0 %v201
  %215 = vmatprep.subr.bf16.mxu0 0
  %216 = vmatpush1.bf16.msra.mxu0 %v202
  %217 = vmatprep.subr.bf16.mxu0 0
  %218 = vmatpush1.bf16.msra.mxu0 %v203
  %219 = vmatprep.subr.bf16.mxu0 0
  %220 = vmatpush1.bf16.msra.mxu0 %v204
  %221 = vmatprep.subr.bf16.mxu0 0
  %222 = vmatpush1.bf16.msra.mxu0 0
  %223 = vmatprep.subr.bf16.mxu0 0
  %224 = vmatpush1.bf16.msra.mxu0 0
  %225 = vmatprep.subr.bf16.mxu0 0
  %226 = vmatpush1.bf16.msra.mxu0 0
  %227 = vmatprep.subr.bf16.mxu0 0
  %228 = vmatpush1.bf16.msra.mxu0 0
  %229 = vmatprep.subr.bf16.mxu0 0
  %230 = vmatpush1.bf16.msra.mxu0 0
  %231 = vmatprep.subr.bf16.mxu0 0
  %232 = vmatpush1.bf16.msra.mxu0 0
  %233 = vmatprep.subr.bf16.mxu0 0
  %234 = vmatpush1.bf16.msra.mxu0 0
  %235 = vmatprep.subr.bf16.mxu0 0
  %236 = vmatpush1.bf16.msra.mxu0 0
  %237 = vmatprep.subr.bf16.mxu0 0
  %238 = vmatpush1.bf16.msra.mxu0 0
  %239 = vmatprep.subr.bf16.mxu0 0
  %240 = vmatpush1.bf16.msra.mxu0 0
  %241 = vmatprep.subr.bf16.mxu0 0
  %242 = vmatpush1.bf16.msra.mxu0 0
  %243 = vmatprep.subr.bf16.mxu0 0
  %244 = vmatpush1.bf16.msra.mxu0 0
  %245 = vmatprep.mubr.bf16.mxu0 0
  %246 = vmatmul.mubr.bf16.gmra.mrb[0].mxu0 %v211
  %v247 = vpop.f32.mrb[0].mxu0
  %v248 = vadd.f32 %v183, %v247
  %v249 = vpop.f32.mrb[0].mxu0
  %v250 = vpop.f32.mrb[0].mxu0
  %v251 = vpop.f32.mrb[0].mxu0
  %252 = vdwg.mxu0
  %v253 = vmax.f32 %v248, 0.0
  %v254 = vld [vmem:[%s7] sm:$0xf]
  %v255 = vld [vmem:[%s7 + $0x4] sm:$0xf]
  %v256 = vld [vmem:[%s7 + $0x8] sm:$0xf]
  %v257 = vld [vmem:[%s7 + $0xc] sm:$0xf]
  %v258 = vld [vmem:[%s7 + $0x10] sm:$0xf]
  %v259 = vld [vmem:[%s7 + $0x14] sm:$0xf]
  %v260 = vld [vmem:[%s7 + $0x18] sm:$0xf]
  %v261 = vld [vmem:[%s7 + $0x1c] sm:$0xf]
  %v262 = vld [vmem:[%s8] sm:$0x1]
  %v263 = vpack.c.bf16 %v253, %v253
  %v265 = vlaneseq
  %v266 = vshrl.u32 %v265, 7
  %v267 = vsub.s32 0, %v266
  %v268 = vrot.slane %v262, %v267
  %v278 = vunpack.c.l.b16 %v254
  %v279 = vunpack.c.l.b16 %v255
  %v280 = vunpack.c.l.b16 %v256
  %v281 = vunpack.c.l.b16 %v257
  %v282 = vunpack.c.l.b16 %v258
  %v283 = vunpack.c.l.b16 %v259
  %v284 = vunpack.c.l.b16 %v260
  %v285 = vunpack.c.l.b16 %v261
  %v286 = vpack.c.b16 %v279, %v278
  %v287 = vpack.c.b16 %v281, %v280
  %v288 = vpack.c.b16 %v283, %v282
  %v289 = vpack.c.b16 %v285, %v284
  %v295 = vsel %vm209, %v263, 0
  %297 = vmatprep.subr.bf16.mxu0 0
  %298 = vmatpush1.bf16.msra.mxu0 %v286
  %299 = vmatprep.subr.bf16.mxu0 0
  %300 = vmatpush1.bf16.msra.mxu0 %v287
  %301 = vmatprep.subr.bf16.mxu0 0
  %302 = vmatpush1.bf16.msra.mxu0 %v288
  %303 = vmatprep.subr.bf16.mxu0 0
  %304 = vmatpush1.bf16.msra.mxu0 %v289
  %305 = vmatprep.subr.bf16.mxu0 0
  %306 = vmatpush1.bf16.msra.mxu0 0
  %307 = vmatprep.subr.bf16.mxu0 0
  %308 = vmatpush1.bf16.msra.mxu0 0
  %309 = vmatprep.subr.bf16.mxu0 0
  %310 = vmatpush1.bf16.msra.mxu0 0
  %311 = vmatprep.subr.bf16.mxu0 0
  %312 = vmatpush1.bf16.msra.mxu0 0
  %313 = vmatprep.subr.bf16.mxu0 0
  %314 = vmatpush1.bf16.msra.mxu0 0
  %315 = vmatprep.subr.bf16.mxu0 0
  %316 = vmatpush1.bf16.msra.mxu0 0
  %317 = vmatprep.subr.bf16.mxu0 0
  %318 = vmatpush1.bf16.msra.mxu0 0
  %319 = vmatprep.subr.bf16.mxu0 0
  %320 = vmatpush1.bf16.msra.mxu0 0
  %321 = vmatprep.subr.bf16.mxu0 0
  %322 = vmatpush1.bf16.msra.mxu0 0
  %323 = vmatprep.subr.bf16.mxu0 0
  %324 = vmatpush1.bf16.msra.mxu0 0
  %325 = vmatprep.subr.bf16.mxu0 0
  %326 = vmatpush1.bf16.msra.mxu0 0
  %327 = vmatprep.subr.bf16.mxu0 0
  %328 = vmatpush1.bf16.msra.mxu0 0
  %329 = vmatprep.mubr.bf16.mxu0 0
  %330 = vmatmul.mubr.bf16.gmra.mrb[0].mxu0 %v295
  %v331 = vpop.f32.mrb[0].mxu0
  %v332 = vadd.f32 %v268, %v331
  %v333 = vpop.f32.mrb[0].mxu0
  %v334 = vpop.f32.mrb[0].mxu0
  %v335 = vpop.f32.mrb[0].mxu0
  %336 = vdwg.mxu0
  %337 = vst [vmem:[%s9] sm:$0xff] %v332
  // Predicated region
  $region38: #{encoder_forward.1} parent=0 // pred_check
    _
  $region39: #{encoder_forward.1} parent=0 // pred_check_branch
    %339 = sbr.rel (0) target = $region41
  $region40: #{encoder_forward.1} parent=0 // pred_region
    _
  $region41: #{encoder_forward.1} parent=0 // pred_fallthru
    _
  // Predicated region
  $region42: #{encoder_forward.1} parent=0 // pred_check
    _
  $region43: #{encoder_forward.1} parent=0 // pred_check_branch
    %341 = sbr.rel (0) target = $region45
  $region44: #{encoder_forward.1} parent=0 // pred_region
    _
  $region45: #{encoder_forward.1} parent=0 // pred_fallthru
    _

</llo_original>
